<compile_context>
chip_gen: v7x
topology: tpu7x:2x2x1
jax: 0.10.0
libtpu: 0.0.40
codegen_flags: <defaults>
</compile_context>

<pallas_src>
import functools

import jax
import jax.numpy as jnp
from jax.experimental import pallas as pl
from jax.experimental.pallas import tpu as pltpu


# ----------------------------- parameter packing -----------------------------

def _pad8(n):
    return ((n + 7) // 8) * 8


def _slab_layout(inputs, fc1, fc2, outputs):
    """Static row offsets of each parameter segment in the packed slab."""
    r_w1 = 0
    r_b1 = r_w1 + _pad8(inputs)
    r_w2 = r_b1 + 8
    r_b2 = r_w2 + _pad8(fc1)
    r_w3 = r_b2 + 8
    r_b3 = r_w3 + _pad8(outputs)
    rows = r_b3 + 8
    cols = max(fc1, fc2, outputs)
    return dict(r_w1=r_w1, r_b1=r_b1, r_w2=r_w2, r_b2=r_b2,
                r_w3=r_w3, r_b3=r_b3, rows=rows, cols=cols)


def pack_params(params, inputs, fc1, fc2, outputs):
    """params = ((W1,b1),(W2,b2),(W3,b3)) in torch nn.Linear layout
    (W: (out_features, in_features), b: (out_features,)).  Returns the slab."""
    lay = _slab_layout(inputs, fc1, fc2, outputs)
    (W1, b1), (W2, b2), (W3, b3) = params
    slab = jnp.zeros((lay["rows"], lay["cols"]), jnp.float32)
    slab = slab.at[lay["r_w1"]:lay["r_w1"] + inputs, :fc1].set(W1.T.astype(jnp.float32))
    slab = slab.at[lay["r_b1"], :fc1].set(b1.astype(jnp.float32))
    slab = slab.at[lay["r_w2"]:lay["r_w2"] + fc1, :fc2].set(W2.T.astype(jnp.float32))
    slab = slab.at[lay["r_b2"], :fc2].set(b2.astype(jnp.float32))
    # fc3 weight stays in torch layout (outputs, fc2): each row is lane-dense.
    slab = slab.at[lay["r_w3"]:lay["r_w3"] + outputs, :fc2].set(W3.astype(jnp.float32))
    slab = slab.at[lay["r_b3"], :outputs].set(b3.astype(jnp.float32))
    return slab


# --------------------------------- kernel ------------------------------------

def _dqn_kernel(x_ref, p_ref, o_ref, *, inputs, fc1, fc2, outputs, lay):
    # .float() cast done in VMEM, after the DMA.
    x = x_ref[...].astype(jnp.float32)                       # (TB, inputs)
    tb = x.shape[0]

    # ---- fc1 + ReLU ----
    w1 = p_ref[lay["r_w1"]:lay["r_w1"] + inputs, 0:fc1]      # (inputs, fc1)
    b1 = p_ref[lay["r_b1"]:lay["r_b1"] + 1, 0:fc1]           # (1, fc1)
    if inputs <= 8:
        # Tiny K: VPU broadcast-MACs instead of a degenerate MXU matmul.
        h1 = jnp.broadcast_to(b1, (tb, fc1))
        for k in range(inputs):
            h1 = h1 + x[:, k:k + 1] * w1[k:k + 1, :]
    else:
        h1 = jnp.dot(x, w1, preferred_element_type=jnp.float32) + b1
    h1 = jnp.maximum(h1, 0.0)

    # ---- fc2 + ReLU (the only MXU matmul) ----
    w2 = p_ref[lay["r_w2"]:lay["r_w2"] + fc1, 0:fc2]         # (fc1, fc2)
    b2 = p_ref[lay["r_b2"]:lay["r_b2"] + 1, 0:fc2]           # (1, fc2)
    h2 = jnp.maximum(jnp.dot(h1, w2, preferred_element_type=jnp.float32) + b2, 0.0)

    # ---- fc3 (Q head) ----
    w3t = p_ref[lay["r_w3"]:lay["r_w3"] + outputs, 0:fc2]    # (outputs, fc2)
    b3 = p_ref[lay["r_b3"]:lay["r_b3"] + 1, 0:outputs]       # (1, outputs)
    if outputs <= 16:
        # Tiny N: per-output lane reductions (VPU/XLU), assembled with a lane
        # mask so we do one full unmasked store of the output tile.
        lane = jax.lax.broadcasted_iota(jnp.int32, (tb, outputs), 1)
        out = jnp.broadcast_to(b3, (tb, outputs))
        for j in range(outputs):
            col = jnp.sum(h2 * w3t[j:j + 1, :], axis=-1, keepdims=True)  # (TB, 1)
            out = out + jnp.where(lane == j, col, 0.0)
    else:
        out = jax.lax.dot_general(h2, w3t, (((1,), (1,)), ((), ())),
                                  preferred_element_type=jnp.float32) + b3
    o_ref[...] = out.astype(o_ref.dtype)


# -------------------------------- wrapper -------------------------------------

def _choose_batch_tile(B):
    if B <= 512:
        return B
    for tb in (512, 256, 128, 64, 32, 16, 8):
        if B % tb == 0:
            return tb
    return B


def dqn_forward(x, slab, *, inputs, outputs, fc1_nodes=32, fc2_nodes=32):
    """x: (1, B, inputs) or (B, inputs), any float dtype.  Returns (B, outputs) f32."""
    # torch's x.squeeze(0): drop the leading dim only if it is size 1.
    if x.ndim == 3 and x.shape[0] == 1:
        x = x[0]
    B = x.shape[0]

    lay = _slab_layout(inputs, fc1_nodes, fc2_nodes, outputs)
    assert slab.shape == (lay["rows"], lay["cols"]), slab.shape

    tb = _choose_batch_tile(B)
    if B % tb != 0:
        tb = B
    grid = (B // tb,)

    kernel = functools.partial(_dqn_kernel, inputs=inputs, fc1=fc1_nodes,
                               fc2=fc2_nodes, outputs=outputs, lay=lay)

    return pl.pallas_call(
        kernel,
        out_shape=jax.ShapeDtypeStruct((B, outputs), jnp.float32),
        grid_spec=pltpu.PrefetchScalarGridSpec(
            num_scalar_prefetch=0,
            grid=grid,
            in_specs=[
                # Activation stream: tiled over the batch grid axis.
                pl.BlockSpec((tb, inputs), lambda i: (i, 0)),
                # Packed weight slab: same block index every step -> stays
                # VMEM-resident across grid iterations (single DMA).
                pl.BlockSpec(slab.shape, lambda i: (0, 0)),
            ],
            out_specs=pl.BlockSpec((tb, outputs), lambda i: (i, 0)),
        ),
        compiler_params=pltpu.CompilerParams(
            dimension_semantics=("parallel",)),   # shards batch across TCs on v7x
    )(x, slab)


# ------------------------------ init / reference ------------------------------

def init_params(key, inputs, outputs, fc1_nodes=32, fc2_nodes=32):
    """torch nn.Linear-style uniform init, in torch layout (W: (out, in))."""
    ks = jax.random.split(key, 6)

    def linear(kw, kb, fan_in, fan_out):
        bound = 1.0 / (fan_in ** 0.5)
        W = jax.random.uniform(kw, (fan_out, fan_in), jnp.float32, -bound, bound)
        b = jax.random.uniform(kb, (fan_out,), jnp.float32, -bound, bound)
        return W, b

    return (linear(ks[0], ks[1], inputs, fc1_nodes),
            linear(ks[2], ks[3], fc1_nodes, fc2_nodes),
            linear(ks[4], ks[5], fc2_nodes, outputs))


def reference_forward(x, params):
    if x.ndim == 3 and x.shape[0] == 1:
        x = x[0]
    x = x.astype(jnp.float32)
    (W1, b1), (W2, b2), (W3, b3) = params
    h = jnp.maximum(x @ W1.T + b1, 0.0)
    h = jnp.maximum(h @ W2.T + b2, 0.0)
    return h @ W3.T + b3


# TODO(synk): DQN.predict (argmax -> action tensor) and reset_head are host-side
# utilities outside forward(); the argmax could be fused into this kernel if
# the surrounding agent step is ever moved on-device.

if __name__ == "__main__":
    key = jax.random.PRNGKey(0)
    k_in, k_par = jax.random.split(key)

    INPUTS, OUTPUTS = 4, 2      # DQN(inputs=4, outputs=2), CartPole-sized
    FC1 = FC2 = 32
    B = 8                       # rows after squeezing the leading singleton dim

    x = jax.random.normal(k_in, (1, B, INPUTS), dtype=jnp.float32)
    params = init_params(k_par, INPUTS, OUTPUTS, FC1, FC2)
    slab = pack_params(params, INPUTS, FC1, FC2, OUTPUTS)   # packed once, reused

    out = dqn_forward(x, slab, inputs=INPUTS, outputs=OUTPUTS,
                      fc1_nodes=FC1, fc2_nodes=FC2)
    out = jax.block_until_ready(out)

    ref = reference_forward(x, params)
    assert out.shape == (B, OUTPUTS), out.shape
    assert jnp.allclose(out, ref, atol=1e-5, rtol=1e-5), "mismatch vs reference"

    print("KERNEL_OK")
</pallas_src>

<mosaic_0001>
module attributes {stable_mosaic.version = 11 : i64} {
  func.func @_dqn_kernel(%arg0: i32, %arg1: memref<8x4xf32, #tpu.memory_space<vmem>>, %arg2: memref<72x32xf32, #tpu.memory_space<vmem>>, %arg3: memref<8x2xf32, #tpu.memory_space<vmem>>) attributes {dimension_semantics = [#tpu.dimension_semantics<parallel>], iteration_bounds = array<i64: 1>, scalar_prefetch = 0 : i64, scratch_operands = 0 : i64, tpu.core_type = #tpu.core_type<tc>, window_params = [{transform_indices = @transform_0, window_bounds = array<i64: 8, 4>}, {pipeline_mode = #tpu.pipeline_mode<synchronous>, transform_indices = @transform_1, window_bounds = array<i64: 72, 32>}, {transform_indices = @transform_2, window_bounds = array<i64: 8, 2>}]} {
    %c0 = arith.constant 0 : index
    %c0_0 = arith.constant 0 : index
    %0 = vector.load %arg1[%c0, %c0_0] : memref<8x4xf32, #tpu.memory_space<vmem>>, vector<8x4xf32>
    %c0_1 = arith.constant 0 : index
    %c0_2 = arith.constant 0 : index
    %1 = vector.load %arg2[%c0_1, %c0_2] : memref<72x32xf32, #tpu.memory_space<vmem>>, vector<4x32xf32>
    %c8 = arith.constant 8 : index
    %c0_3 = arith.constant 0 : index
    %2 = vector.load %arg2[%c8, %c0_3] : memref<72x32xf32, #tpu.memory_space<vmem>>, vector<1x32xf32>
    %3 = vector.shape_cast %2 : vector<1x32xf32> to vector<1x32xf32>
    %4 = vector.broadcast %3 : vector<1x32xf32> to vector<8x32xf32>
    %5 = vector.extract_strided_slice %0 {offsets = [0, 0], sizes = [8, 1], strides = [1, 1]} : vector<8x4xf32> to vector<8x1xf32>
    %6 = vector.extract_strided_slice %1 {offsets = [0, 0], sizes = [1, 32], strides = [1, 1]} : vector<4x32xf32> to vector<1x32xf32>
    %7 = vector.broadcast %5 : vector<8x1xf32> to vector<8x32xf32>
    %8 = vector.broadcast %6 : vector<1x32xf32> to vector<8x32xf32>
    %9 = arith.mulf %7, %8 : vector<8x32xf32>
    %10 = arith.addf %4, %9 : vector<8x32xf32>
    %11 = vector.extract_strided_slice %0 {offsets = [0, 1], sizes = [8, 1], strides = [1, 1]} : vector<8x4xf32> to vector<8x1xf32>
    %12 = vector.extract_strided_slice %1 {offsets = [1, 0], sizes = [1, 32], strides = [1, 1]} : vector<4x32xf32> to vector<1x32xf32>
    %13 = vector.broadcast %11 : vector<8x1xf32> to vector<8x32xf32>
    %14 = vector.broadcast %12 : vector<1x32xf32> to vector<8x32xf32>
    %15 = arith.mulf %13, %14 : vector<8x32xf32>
    %16 = arith.addf %10, %15 : vector<8x32xf32>
    %17 = vector.extract_strided_slice %0 {offsets = [0, 2], sizes = [8, 1], strides = [1, 1]} : vector<8x4xf32> to vector<8x1xf32>
    %18 = vector.extract_strided_slice %1 {offsets = [2, 0], sizes = [1, 32], strides = [1, 1]} : vector<4x32xf32> to vector<1x32xf32>
    %19 = vector.broadcast %17 : vector<8x1xf32> to vector<8x32xf32>
    %20 = vector.broadcast %18 : vector<1x32xf32> to vector<8x32xf32>
    %21 = arith.mulf %19, %20 : vector<8x32xf32>
    %22 = arith.addf %16, %21 : vector<8x32xf32>
    %23 = vector.extract_strided_slice %0 {offsets = [0, 3], sizes = [8, 1], strides = [1, 1]} : vector<8x4xf32> to vector<8x1xf32>
    %24 = vector.extract_strided_slice %1 {offsets = [3, 0], sizes = [1, 32], strides = [1, 1]} : vector<4x32xf32> to vector<1x32xf32>
    %25 = vector.broadcast %23 : vector<8x1xf32> to vector<8x32xf32>
    %26 = vector.broadcast %24 : vector<1x32xf32> to vector<8x32xf32>
    %27 = arith.mulf %25, %26 : vector<8x32xf32>
    %28 = arith.addf %22, %27 : vector<8x32xf32>
    %cst = arith.constant 0.000000e+00 : f32
    %29 = vector.broadcast %cst : f32 to vector<8x32xf32>
    %30 = arith.maximumf %28, %29 : vector<8x32xf32>
    %c16 = arith.constant 16 : index
    %c0_4 = arith.constant 0 : index
    %31 = vector.load %arg2[%c16, %c0_4] : memref<72x32xf32, #tpu.memory_space<vmem>>, vector<32x32xf32>
    %c48 = arith.constant 48 : index
    %c0_5 = arith.constant 0 : index
    %32 = vector.load %arg2[%c48, %c0_5] : memref<72x32xf32, #tpu.memory_space<vmem>>, vector<1x32xf32>
    %cst_6 = arith.constant dense<0.000000e+00> : vector<8x32xf32>
    %33 = tpu.matmul %30, %31, %cst_6 {dimension_numbers = #tpu.dot_dimension_numbers<[1], [0], [0], [1], [0, 0, 1, 1], [], []>} : vector<8x32xf32>, vector<32x32xf32>, vector<8x32xf32> -> vector<8x32xf32>
    %34 = vector.broadcast %32 : vector<1x32xf32> to vector<8x32xf32>
    %35 = arith.addf %33, %34 : vector<8x32xf32>
    %cst_7 = arith.constant 0.000000e+00 : f32
    %36 = vector.broadcast %cst_7 : f32 to vector<8x32xf32>
    %37 = arith.maximumf %35, %36 : vector<8x32xf32>
    %c56 = arith.constant 56 : index
    %c0_8 = arith.constant 0 : index
    %38 = vector.load %arg2[%c56, %c0_8] : memref<72x32xf32, #tpu.memory_space<vmem>>, vector<2x32xf32>
    %c64 = arith.constant 64 : index
    %c0_9 = arith.constant 0 : index
    %39 = vector.load %arg2[%c64, %c0_9] : memref<72x32xf32, #tpu.memory_space<vmem>>, vector<1x2xf32>
    %40 = tpu.iota {dimensions = array<i32: 1>} : vector<8x2xi32>
    %41 = vector.shape_cast %39 : vector<1x2xf32> to vector<1x2xf32>
    %42 = vector.broadcast %41 : vector<1x2xf32> to vector<8x2xf32>
    %43 = vector.extract_strided_slice %38 {offsets = [0, 0], sizes = [1, 32], strides = [1, 1]} : vector<2x32xf32> to vector<1x32xf32>
    %44 = vector.broadcast %43 : vector<1x32xf32> to vector<8x32xf32>
    %45 = arith.mulf %37, %44 : vector<8x32xf32>
    %cst_10 = arith.constant dense<0.000000e+00> : vector<8xf32>
    %46 = vector.multi_reduction <add>, %45, %cst_10 [1] : vector<8x32xf32> to vector<8xf32>
    %47 = vector.shape_cast %46 : vector<8xf32> to vector<8x1xf32>
    %c0_i32 = arith.constant 0 : i32
    %48 = vector.broadcast %c0_i32 : i32 to vector<8x2xi32>
    %49 = arith.cmpi eq, %40, %48 : vector<8x2xi32>
    %cst_11 = arith.constant 0.000000e+00 : f32
    %50 = vector.shape_cast %47 : vector<8x1xf32> to vector<8x1xf32>
    %51 = vector.broadcast %50 : vector<8x1xf32> to vector<8x2xf32>
    %52 = vector.broadcast %cst_11 : f32 to vector<8x2xf32>
    %53 = arith.select %49, %51, %52 : vector<8x2xi1>, vector<8x2xf32>
    %54 = arith.addf %42, %53 : vector<8x2xf32>
    %55 = vector.extract_strided_slice %38 {offsets = [1, 0], sizes = [1, 32], strides = [1, 1]} : vector<2x32xf32> to vector<1x32xf32>
    %56 = vector.broadcast %55 : vector<1x32xf32> to vector<8x32xf32>
    %57 = arith.mulf %37, %56 : vector<8x32xf32>
    %cst_12 = arith.constant dense<0.000000e+00> : vector<8xf32>
    %58 = vector.multi_reduction <add>, %57, %cst_12 [1] : vector<8x32xf32> to vector<8xf32>
    %59 = vector.shape_cast %58 : vector<8xf32> to vector<8x1xf32>
    %c1_i32 = arith.constant 1 : i32
    %60 = vector.broadcast %c1_i32 : i32 to vector<8x2xi32>
    %61 = arith.cmpi eq, %40, %60 : vector<8x2xi32>
    %cst_13 = arith.constant 0.000000e+00 : f32
    %62 = vector.shape_cast %59 : vector<8x1xf32> to vector<8x1xf32>
    %63 = vector.broadcast %62 : vector<8x1xf32> to vector<8x2xf32>
    %64 = vector.broadcast %cst_13 : f32 to vector<8x2xf32>
    %65 = arith.select %61, %63, %64 : vector<8x2xi1>, vector<8x2xf32>
    %66 = arith.addf %54, %65 : vector<8x2xf32>
    %c0_14 = arith.constant 0 : index
    %c0_15 = arith.constant 0 : index
    %67 = vector.load %arg3[%c0_14, %c0_15] : memref<8x2xf32, #tpu.memory_space<vmem>>, vector<8x2xf32>
    tpu.vector_store %arg3[%c0_14, %c0_15], %66 {strides = array<i32>} : memref<8x2xf32, #tpu.memory_space<vmem>>, vector<8x2xf32>,
    return
  }
  func.func @transform_0(%arg0: i32) -> (i32, i32) {
    %c0_i32 = arith.constant 0 : i32
    %c0_i32_0 = arith.constant 0 : i32
    return %arg0, %c0_i32 : i32, i32
  }
  func.func @transform_1(%arg0: i32) -> (i32, i32) {
    %c0_i32 = arith.constant 0 : i32
    %c0_i32_0 = arith.constant 0 : i32
    %c0_i32_1 = arith.constant 0 : i32
    return %c0_i32, %c0_i32_0 : i32, i32
  }
  func.func @transform_2(%arg0: i32) -> (i32, i32) {
    %c0_i32 = arith.constant 0 : i32
    %c0_i32_0 = arith.constant 0 : i32
    return %arg0, %c0_i32 : i32, i32
  }
}

</mosaic_0001>

<llo_original>
// kernel: tpu_custom_call.1
$region0: #{tpu_custom_call.1}
  #allocation0 [shape = 'u32[]', space=smem, size = 0x4, offset = 0x4, fixed_abs, tag = 'smem constant byte address 0x4 - core index']
  #allocation1 [shape = 'u32[144,128]{1,0:T(1,128)}', space=vmem, size = 0x12000, scoped, tag = 'internal scratch']
  %s0 = inlined_call_operand.vmem [shape: f32[8,4], index: 0, kind: input, shape index: {}]
  %s1 = inlined_call_operand.vmem [shape: f32[72,32], index: 1, kind: input, shape index: {}]
  %s2 = inlined_call_operand.vmem [shape: f32[8,2], index: 2, kind: output, shape index: {}]
  %s3 = sld [smem:[#allocation0]]
  $region18: #{tpu_custom_call.1} parent=0
    _
  %s5 = ssub.s32 1, %s3
  %s6 = scalar_select 0, %s5, %s3
  // Predicated region
  $region2: #{tpu_custom_call.1} parent=0 // pred_check
    _
  $region3: #{tpu_custom_call.1} parent=0 // pred_check_branch
    %8 = sbr.rel (0) target = $region5
  $region4: #{tpu_custom_call.1} parent=0 // pred_region
    _
  $region5: #{tpu_custom_call.1} parent=0 // pred_fallthru
    _
  // Predicated region
  $region6: #{tpu_custom_call.1} parent=0 // pred_check
    _
  $region7: #{tpu_custom_call.1} parent=0 // pred_check_branch
    %10 = sbr.rel (0) target = $region9
  $region8: #{tpu_custom_call.1} parent=0 // pred_region
    _
  $region9: #{tpu_custom_call.1} parent=0 // pred_fallthru
    _
  %v11 = vld [vmem:[%s0] sm:$0xff]
  %v12 = vld [vmem:[%s1] sm:$0xf]
  %v13 = vld [vmem:[%s1 + $0x8] sm:$0x1]
  %v14 = vlaneseq
  %v15 = vshrl.u32 %v14, 7
  %v16 = vsub.s32 0, %v15
  %v17 = vrot.slane %v13, %v16
  %19 = vset.pattern.permute.xlu0 0
  %20 = vperm.xlu0 %19, %v11
  %v21 = vpop.permute.xlu0 %20
  %v23 = vlaneseq
  %v24 = vshrl.u32 %v23, 7
  %v25 = vsub.s32 0, %v24
  %v26 = vrot.slane %v12, %v25
  %v27 = vmul.f32 %v21, %v26
  %v28 = vadd.f32 %v17, %v27
  %29 = vset.pattern.permute.xlu0 1
  %30 = vperm.xlu0 %29, %v11
  %v31 = vpop.permute.xlu0 %30
  %v33 = vlaneseq
  %v34 = vshrl.u32 %v33, 7
  %v35 = vsub.s32 1, %v34
  %v36 = vrot.slane %v12, %v35
  %v37 = vmul.f32 %v31, %v36
  %v38 = vadd.f32 %v28, %v37
  %39 = vset.pattern.permute.xlu0 2
  %40 = vperm.xlu0 %39, %v11
  %v41 = vpop.permute.xlu0 %40
  %v43 = vlaneseq
  %v44 = vshrl.u32 %v43, 7
  %v45 = vsub.s32 2, %v44
  %v46 = vrot.slane %v12, %v45
  %v47 = vmul.f32 %v41, %v46
  %v48 = vadd.f32 %v38, %v47
  %49 = vset.pattern.permute.xlu0 3
  %50 = vperm.xlu0 %49, %v11
  %v51 = vpop.permute.xlu0 %50
  %v53 = vlaneseq
  %v54 = vshrl.u32 %v53, 7
  %v55 = vsub.s32 3, %v54
  %v56 = vrot.slane %v12, %v55
  %v57 = vmul.f32 %v51, %v56
  %v58 = vadd.f32 %v48, %v57
  %v59 = vmax.f32 %v58, 0.0
  %v60 = vld [vmem:[%s1 + $0x10] sm:$0xff]
  %v61 = vld [vmem:[%s1 + $0x18] sm:$0xff]
  %v62 = vld [vmem:[%s1 + $0x20] sm:$0xff]
  %v63 = vld [vmem:[%s1 + $0x28] sm:$0xff]
  %v64 = vld [vmem:[%s1 + $0x30] sm:$0x1]
  %v65 = vlaneseq
  %v66 = vshrl.u32 %v65, 7
  %v67 = vsub.s32 0, %v66
  %v68 = vrot.slane %v64, %v67
  %vm69 = vcmask 261120
  %v71 = vsel %vm69, %v59, 0
  %73 = vmatprep.subr.mxu0 0.0
  %74 = vmatpush1.msra.mxu0 %v60
  %75 = vmatprep.subr.mxu0 0.0
  %76 = vmatpush1.msra.mxu0 %v61
  %77 = vmatprep.subr.mxu0 0.0
  %78 = vmatpush1.msra.mxu0 %v62
  %79 = vmatprep.subr.mxu0 0.0
  %80 = vmatpush1.msra.mxu0 %v63
  %81 = vmatprep.subr.mxu0 0.0
  %82 = vmatpush1.msra.mxu0 0.0
  %83 = vmatprep.subr.mxu0 0.0
  %84 = vmatpush1.msra.mxu0 0.0
  %85 = vmatprep.subr.mxu0 0.0
  %86 = vmatpush1.msra.mxu0 0.0
  %87 = vmatprep.subr.mxu0 0.0
  %88 = vmatpush1.msra.mxu0 0.0
  %89 = vmatprep.subr.mxu0 0.0
  %90 = vmatpush1.msra.mxu0 0.0
  %91 = vmatprep.subr.mxu0 0.0
  %92 = vmatpush1.msra.mxu0 0.0
  %93 = vmatprep.subr.mxu0 0.0
  %94 = vmatpush1.msra.mxu0 0.0
  %95 = vmatprep.subr.mxu0 0.0
  %96 = vmatpush1.msra.mxu0 0.0
  %97 = vmatprep.subr.mxu0 0.0
  %98 = vmatpush1.msra.mxu0 0.0
  %99 = vmatprep.subr.mxu0 0.0
  %100 = vmatpush1.msra.mxu0 0.0
  %101 = vmatprep.subr.mxu0 0.0
  %102 = vmatpush1.msra.mxu0 0.0
  %103 = vmatprep.subr.mxu0 0.0
  %104 = vmatpush1.msra.mxu0 0.0
  %105 = vmatprep.subr.mxu0 0.0
  %106 = vmatpush1.msra.mxu0 0.0
  %107 = vmatprep.subr.mxu0 0.0
  %108 = vmatpush1.msra.mxu0 0.0
  %109 = vmatprep.subr.mxu0 0.0
  %110 = vmatpush1.msra.mxu0 0.0
  %111 = vmatprep.subr.mxu0 0.0
  %112 = vmatpush1.msra.mxu0 0.0
  %113 = vmatprep.subr.mxu0 0.0
  %114 = vmatpush1.msra.mxu0 0.0
  %115 = vmatprep.subr.mxu0 0.0
  %116 = vmatpush1.msra.mxu0 0.0
  %117 = vmatprep.subr.mxu0 0.0
  %118 = vmatpush1.msra.mxu0 0.0
  %119 = vmatprep.subr.mxu0 0.0
  %120 = vmatpush1.msra.mxu0 0.0
  %121 = vmatprep.subr.mxu0 0.0
  %122 = vmatpush1.msra.mxu0 0.0
  %123 = vmatprep.subr.mxu0 0.0
  %124 = vmatpush1.msra.mxu0 0.0
  %125 = vmatprep.subr.mxu0 0.0
  %126 = vmatpush1.msra.mxu0 0.0
  %127 = vmatprep.subr.mxu0 0.0
  %128 = vmatpush1.msra.mxu0 0.0
  %129 = vmatprep.subr.mxu0 0.0
  %130 = vmatpush1.msra.mxu0 0.0
  %131 = vmatprep.subr.mxu0 0.0
  %132 = vmatpush1.msra.mxu0 0.0
  %133 = vmatprep.subr.mxu0 0.0
  %134 = vmatpush1.msra.mxu0 0.0
  %135 = vmatprep.subr.mxu0 0.0
  %136 = vmatpush1.msra.mxu0 0.0
  %137 = vmatprep.mubr.f32.mxu0 0.0
  %138 = vmatmul.mubr.f32.gmra.mrb[0].mxu0 %v71
  %v139 = vpop.f32.mrb[0].mxu0
  %v140 = vadd.f32 %v68, %v139
  %v141 = vpop.f32.mrb[0].mxu0
  %142 = vdwg.mxu0
  %v143 = vmax.f32 %v140, 0.0
  %v144 = vld [vmem:[%s1 + $0x38] sm:$0x3]
  %v145 = vld [vmem:[%s1 + $0x40] sm:$0x1]
  %v146 = vlaneseq
  %v147 = vand.u32 %v146, 127
  %v148 = vlaneseq
  %v149 = vshrl.u32 %v148, 7
  %v150 = vsub.s32 0, %v149
  %v151 = vrot.slane %v145, %v150
  %v152 = vlaneseq
  %v153 = vshrl.u32 %v152, 7
  %v154 = vsub.s32 0, %v153
  %v155 = vrot.slane %v144, %v154
  %v156 = vmul.f32 %v143, %v155
  %v157 = vsel %vm69, %v156, 0.0
  %158 = vadd.xlane.f32.xlu0 %v157
  %v159 = vpop.xlane.xlu0 %158
  %vm160 = vcmp.eq.s32.totalorder %v147, 0
  %v161 = vsel %vm160, %v159, 0.0
  %v162 = vadd.f32 %v151, %v161
  %v163 = vlaneseq
  %v164 = vshrl.u32 %v163, 7
  %v165 = vsub.s32 1, %v164
  %v166 = vrot.slane %v144, %v165
  %v167 = vmul.f32 %v143, %v166
  %v168 = vsel %vm69, %v167, 0.0
  %169 = vadd.xlane.f32.xlu0 %v168
  %v170 = vpop.xlane.xlu0 %169
  %vm171 = vcmp.eq.s32.totalorder %v147, 1
  %v172 = vsel %vm171, %v170, 0.0
  %v173 = vadd.f32 %v162, %v172
  %vm174 = vcmask 15360
  %175 = vst.msk [vmem:[%s2] sm:$0xff] %vm174, %v173
  // Predicated region
  $region10: #{tpu_custom_call.1} parent=0 // pred_check
    _
  $region11: #{tpu_custom_call.1} parent=0 // pred_check_branch
    %177 = sbr.rel (0) target = $region13
  $region12: #{tpu_custom_call.1} parent=0 // pred_region
    _
  $region13: #{tpu_custom_call.1} parent=0 // pred_fallthru
    _
  // Predicated region
  $region14: #{tpu_custom_call.1} parent=0 // pred_check
    _
  $region15: #{tpu_custom_call.1} parent=0 // pred_check_branch
    %179 = sbr.rel (0) target = $region17
  $region16: #{tpu_custom_call.1} parent=0 // pred_region
    _
  $region17: #{tpu_custom_call.1} parent=0 // pred_fallthru
    _

</llo_original>
